<compile_context>
chip_gen: v5e
topology: v5e:2x2
jax: 0.10.0
libtpu: 0.0.40
codegen_flags: <defaults>
</compile_context>

<pallas_src>
import math

import jax
import jax.numpy as jnp
from jax import lax
from jax.experimental import pallas as pl
from jax.experimental.pallas import tpu as pltpu


def _round_up(x, m):
    return (x + m - 1) // m * m


_VMEM_LIMIT = 32 * 1024 * 1024  # safe on v5e / v6e / v7x (>= default scoped)


# --------------------------------------------------------------------------- #
# Fused tiled matmul + per-column BatchNorm statistics (sum, sum of squares)
# --------------------------------------------------------------------------- #
def _mm_stats_kernel(a_ref, b_ref, y_ref, sum_ref, sq_ref, acc_ref):
    @pl.when(pl.program_id(2) == 0)
    def _():
        acc_ref[...] = jnp.zeros_like(acc_ref)

    acc_ref[...] += jnp.dot(a_ref[...], b_ref[...],
                            preferred_element_type=jnp.float32)

    @pl.when(pl.program_id(2) == pl.num_programs(2) - 1)
    def _():
        acc = acc_ref[...]
        y_ref[...] = acc.astype(y_ref.dtype)
        s = jnp.sum(acc, axis=0, keepdims=True)          # (1, TN) f32
        q = jnp.sum(acc * acc, axis=0, keepdims=True)    # (1, TN) f32
        sum_ref[...] = jnp.broadcast_to(s, sum_ref.shape)
        sq_ref[...] = jnp.broadcast_to(q, sq_ref.shape)


def pallas_matmul_bn_stats(a, b, out_dtype=jnp.bfloat16):
    """a: [M, K] bf16, b: [K, N] bf16 -> (y [Mp, N] bf16, col_sum [N] f32,
    col_sq [N] f32).  Padded rows of a are zero, so they contribute 0 to stats."""
    M, K = a.shape
    K2, N = b.shape
    assert K == K2

    M8 = _round_up(M, 8)
    TM = 256 if M8 >= 256 else M8
    Mp = _round_up(M, TM)

    # Lane-dense 256-wide N tile when the channel count allows it; otherwise a
    # single full-extent block (64 / 128 channels -> no N padding needed).
    TN = 256 if (N >= 256 and N % 256 == 0) else N

    # K tiling with a 512-deep tile when it divides evenly; otherwise a single
    # full-extent K block (no padding of K, e.g. conv1's K = 147 stays 147).
    TK = 512 if (K > 512 and K % 512 == 0) else K

    a_p = a if Mp == M else jnp.pad(a, ((0, Mp - M), (0, 0)))

    grid = (Mp // TM, N // TN, K // TK)
    n_mt = Mp // TM

    y, s, q = pl.pallas_call(
        _mm_stats_kernel,
        out_shape=(
            jax.ShapeDtypeStruct((Mp, N), out_dtype),
            jax.ShapeDtypeStruct((n_mt, 8, N), jnp.float32),
            jax.ShapeDtypeStruct((n_mt, 8, N), jnp.float32),
        ),
        grid=grid,
        in_specs=[
            pl.BlockSpec((TM, TK), lambda i, j, k: (i, k)),
            pl.BlockSpec((TK, TN), lambda i, j, k: (k, j)),
        ],
        out_specs=(
            pl.BlockSpec((TM, TN), lambda i, j, k: (i, j)),
            pl.BlockSpec((1, 8, TN), lambda i, j, k: (i, 0, j)),
            pl.BlockSpec((1, 8, TN), lambda i, j, k: (i, 0, j)),
        ),
        scratch_shapes=[pltpu.VMEM((TM, TN), jnp.float32)],
        compiler_params=pltpu.CompilerParams(
            dimension_semantics=("parallel", "parallel", "arbitrary"),
            vmem_limit_bytes=_VMEM_LIMIT,
        ),
    )(a_p, b)

    col_sum = jnp.sum(s[:, 0, :], axis=0)
    col_sq = jnp.sum(q[:, 0, :], axis=0)
    return y, col_sum, col_sq


# --------------------------------------------------------------------------- #
# BatchNorm normalize (+residual) (+ReLU), tiled over M
# --------------------------------------------------------------------------- #
def _make_bn_apply_kernel(relu, has_res):
    if has_res:
        def kernel(y_ref, s_ref, b_ref, r_ref, o_ref):
            v = (y_ref[...].astype(jnp.float32) * s_ref[...] + b_ref[...]
                 + r_ref[...].astype(jnp.float32))
            if relu:
                v = jnp.maximum(v, 0.0)
            o_ref[...] = v.astype(o_ref.dtype)
    else:
        def kernel(y_ref, s_ref, b_ref, o_ref):
            v = y_ref[...].astype(jnp.float32) * s_ref[...] + b_ref[...]
            if relu:
                v = jnp.maximum(v, 0.0)
            o_ref[...] = v.astype(o_ref.dtype)
    return kernel


def pallas_bn_apply(y, scale, shift, residual=None, relu=True,
                    out_dtype=jnp.bfloat16):
    """y: [Mp, C]; scale/shift: [C] f32; residual: [Mp, C] or None."""
    Mp, C = y.shape
    TM = 256 if Mp >= 256 else Mp      # Mp is always a multiple of TM
    grid = (Mp // TM,)

    row_spec = pl.BlockSpec((TM, C), lambda i: (i, 0))
    vec_spec = pl.BlockSpec((1, C), lambda i: (0, 0))

    inputs = [y, scale.reshape(1, C).astype(jnp.float32),
              shift.reshape(1, C).astype(jnp.float32)]
    in_specs = [row_spec, vec_spec, vec_spec]
    if residual is not None:
        inputs.append(residual)
        in_specs.append(row_spec)

    return pl.pallas_call(
        _make_bn_apply_kernel(relu, residual is not None),
        out_shape=jax.ShapeDtypeStruct((Mp, C), out_dtype),
        grid=grid,
        in_specs=in_specs,
        out_specs=row_spec,
        compiler_params=pltpu.CompilerParams(
            dimension_semantics=("parallel",)),
    )(*inputs)


# --------------------------------------------------------------------------- #
# MaxPool 3x3 stride 2 pad 1, 9-way max tiled over M
# --------------------------------------------------------------------------- #
def _maxpool_kernel(x_ref, o_ref):
    acc = x_ref[0]
    for k in range(1, 9):
        acc = jnp.maximum(acc, x_ref[k])
    o_ref[...] = acc


def pallas_maxpool_3x3_s2(x_nhwc):
    N, H, W, C = x_nhwc.shape
    Ho = (H + 2 - 3) // 2 + 1
    Wo = (W + 2 - 3) // 2 + 1
    neg = float(jnp.finfo(jnp.bfloat16).min)
    xp = jnp.pad(x_nhwc, ((0, 0), (1, 1), (1, 1), (0, 0)), constant_values=neg)
    wins = []
    for i in range(3):
        for j in range(3):
            wins.append(
                lax.slice(
                    xp,
                    (0, i, j, 0),
                    (N, i + (Ho - 1) * 2 + 1, j + (Wo - 1) * 2 + 1, C),
                    (1, 2, 2, 1),
                ).reshape(N * Ho * Wo, C))
    stacked = jnp.stack(wins, axis=0)  # [9, M, C]

    M = N * Ho * Wo
    M8 = _round_up(M, 8)
    TM = 256 if M8 >= 256 else M8
    Mp = _round_up(M, TM)
    if Mp != M:
        stacked = jnp.pad(stacked, ((0, 0), (0, Mp - M), (0, 0)))

    out = pl.pallas_call(
        _maxpool_kernel,
        out_shape=jax.ShapeDtypeStruct((Mp, C), x_nhwc.dtype),
        grid=(Mp // TM,),
        in_specs=[pl.BlockSpec((9, TM, C), lambda i: (0, i, 0))],
        out_specs=pl.BlockSpec((TM, C), lambda i: (i, 0)),
        compiler_params=pltpu.CompilerParams(
            dimension_semantics=("parallel",)),
    )(stacked)
    return out[:M].reshape(N, Ho, Wo, C)


# --------------------------------------------------------------------------- #
# Conv / BasicBlock glue
# --------------------------------------------------------------------------- #
def _extract_patches(x_nhwc, kh, kw, stride, pad):
    N, H, W, C = x_nhwc.shape
    Ho = (H + 2 * pad - kh) // stride + 1
    Wo = (W + 2 * pad - kw) // stride + 1
    xp = jnp.pad(x_nhwc, ((0, 0), (pad, pad), (pad, pad), (0, 0)))
    cols = []
    for i in range(kh):
        for j in range(kw):
            cols.append(
                lax.slice(
                    xp,
                    (0, i, j, 0),
                    (N, i + (Ho - 1) * stride + 1, j + (Wo - 1) * stride + 1, C),
                    (1, stride, stride, 1),
                ))
    patches = jnp.stack(cols, axis=3)  # [N, Ho, Wo, kh*kw, C]
    return patches.reshape(N * Ho * Wo, kh * kw * C), Ho, Wo


def conv_bn_act(x_nhwc, w, gamma, beta, stride, pad, relu=True, residual=None,
                eps=1e-5):
    """Conv2d (no bias, weight [kh,kw,Cin,Cout]) + train-mode BN [+res] [+ReLU]."""
    N = x_nhwc.shape[0]
    kh, kw, cin, cout = w.shape
    # TODO(synk): im2col still materializes kh*kw x the activation volume; a
    # shift-and-accumulate conv (per-tap [TM,Cin]x[Cin,Cout] into the same
    # accumulator) would remove that HBM traffic.
    a, Ho, Wo = _extract_patches(x_nhwc.astype(jnp.bfloat16), kh, kw, stride, pad)
    wm = w.reshape(kh * kw * cin, cout).astype(jnp.bfloat16)

    M = N * Ho * Wo
    y, col_sum, col_sq = pallas_matmul_bn_stats(a, wm)   # y: [Mp, cout] bf16
    Mp = y.shape[0]

    # Batch statistics (biased variance) from the fused matmul-flush sums.
    # Clamp var >= 0 against E[x^2]-E[x]^2 cancellation.
    mean = col_sum / M
    var = jnp.maximum(col_sq / M - mean * mean, 0.0)
    inv_std = lax.rsqrt(var + eps)
    scale = gamma.astype(jnp.float32) * inv_std
    shift = beta.astype(jnp.float32) - mean * scale

    res2d = None
    if residual is not None:
        res2d = residual.reshape(M, cout).astype(jnp.bfloat16)
        if Mp != M:
            res2d = jnp.pad(res2d, ((0, Mp - M), (0, 0)))

    out = pallas_bn_apply(y, scale, shift, residual=res2d, relu=relu)
    return out[:M].reshape(N, Ho, Wo, cout)


def basic_block(x_nhwc, p, stride):
    out = conv_bn_act(x_nhwc, p["conv1_w"], p["bn1_g"], p["bn1_b"],
                      stride, 1, relu=True)
    if "ds_w" in p:
        identity = conv_bn_act(x_nhwc, p["ds_w"], p["ds_g"], p["ds_b"],
                               stride, 0, relu=False)
    else:
        identity = x_nhwc
    # out = relu(bn2(conv2(out)) + identity), residual+ReLU fused in BN apply
    out = conv_bn_act(out, p["conv2_w"], p["bn2_g"], p["bn2_b"], 1, 1,
                      relu=True, residual=identity)
    return out


# --------------------------------------------------------------------------- #
# Parameters (deterministic synthetic init, ResNet-18 shapes)
# --------------------------------------------------------------------------- #
def _conv_init(key, kh, kw, cin, cout):
    fan_in = kh * kw * cin
    return jax.random.normal(key, (kh, kw, cin, cout), jnp.float32) * math.sqrt(2.0 / fan_in)


def init_encoder_params(key):
    keys = iter(jax.random.split(key, 64))
    params = {
        "conv1_w": _conv_init(next(keys), 7, 7, 3, 64),
        "bn1_g": jnp.ones((64,), jnp.float32),
        "bn1_b": jnp.zeros((64,), jnp.float32),
    }
    stage_cfg = [("layer1", 64, 64, 1), ("layer2", 64, 128, 2),
                 ("layer3", 128, 256, 2), ("layer4", 256, 512, 2)]
    for name, cin, cout, stride in stage_cfg:
        blocks = []
        for b in range(2):
            bc_in = cin if b == 0 else cout
            blk = {
                "conv1_w": _conv_init(next(keys), 3, 3, bc_in, cout),
                "bn1_g": jnp.ones((cout,), jnp.float32),
                "bn1_b": jnp.zeros((cout,), jnp.float32),
                "conv2_w": _conv_init(next(keys), 3, 3, cout, cout),
                "bn2_g": jnp.ones((cout,), jnp.float32),
                "bn2_b": jnp.zeros((cout,), jnp.float32),
            }
            if b == 0 and (stride != 1 or bc_in != cout):
                blk["ds_w"] = _conv_init(next(keys), 1, 1, bc_in, cout)
                blk["ds_g"] = jnp.ones((cout,), jnp.float32)
                blk["ds_b"] = jnp.zeros((cout,), jnp.float32)
            blocks.append(blk)
        params[name] = blocks
    return params


# --------------------------------------------------------------------------- #
# Encoder_Block.forward
# --------------------------------------------------------------------------- #
def encoder_block_forward(x_nchw, params):
    """Returns [input, layer0, layer1, layer2, layer3, layer4], all NCHW."""
    # NCHW -> NHWC; activations kept bf16 between layers (f32 accumulation/stats)
    x = jnp.transpose(x_nchw, (0, 2, 3, 1)).astype(jnp.bfloat16)

    # layer0 = conv1(7x7/2) + bn1 + relu
    layer0 = conv_bn_act(x, params["conv1_w"], params["bn1_g"], params["bn1_b"],
                         stride=2, pad=3, relu=True)

    # layer1 = maxpool(3x3/2) + 2 BasicBlocks (64 -> 64)
    h = pallas_maxpool_3x3_s2(layer0)
    for blk in params["layer1"]:
        h = basic_block(h, blk, stride=1)
    layer1 = h

    def run_stage(h, blocks, first_stride):
        for i, blk in enumerate(blocks):
            h = basic_block(h, blk, stride=first_stride if i == 0 else 1)
        return h

    layer2 = run_stage(layer1, params["layer2"], 2)
    layer3 = run_stage(layer2, params["layer3"], 2)
    layer4 = run_stage(layer3, params["layer4"], 2)

    def to_nchw(t):
        return jnp.transpose(t, (0, 3, 1, 2)).astype(jnp.float32)

    return [x_nchw, to_nchw(layer0), to_nchw(layer1), to_nchw(layer2),
            to_nchw(layer3), to_nchw(layer4)]


if __name__ == "__main__":
    key = jax.random.PRNGKey(0)
    pkey, xkey = jax.random.split(key)
    params = init_encoder_params(pkey)

    # Small NCHW input consistent with resnet18 (3 input channels).
    x = jax.random.normal(xkey, (2, 3, 32, 32), jnp.float32)

    outs = encoder_block_forward(x, params)
    outs = jax.block_until_ready(outs)

    expected = [(2, 3, 32, 32), (2, 64, 16, 16), (2, 64, 8, 8),
                (2, 128, 4, 4), (2, 256, 2, 2), (2, 512, 1, 1)]
    assert [tuple(o.shape) for o in outs] == expected, [o.shape for o in outs]
    assert all(bool(jnp.all(jnp.isfinite(o))) for o in outs)

    print("KERNEL_OK")
</pallas_src>

<mosaic_0001>
module attributes {stable_mosaic.version = 11 : i64} {
  func.func @_mm_stats_kernel(%arg0: i32, %arg1: i32, %arg2: i32, %arg3: memref<256x147xbf16, #tpu.memory_space<vmem>>, %arg4: memref<147x64xbf16, #tpu.memory_space<vmem>>, %arg5: memref<256x64xbf16, #tpu.memory_space<vmem>>, %arg6: memref<1x8x64xf32, #tpu.memory_space<vmem>>, %arg7: memref<1x8x64xf32, #tpu.memory_space<vmem>>, %arg8: memref<256x64xf32, #tpu.memory_space<vmem>>) attributes {dimension_semantics = [#tpu.dimension_semantics<parallel>, #tpu.dimension_semantics<parallel>, #tpu.dimension_semantics<arbitrary>], iteration_bounds = array<i64: 2, 1, 1>, scalar_prefetch = 0 : i64, scratch_operands = 1 : i64, tpu.core_type = #tpu.core_type<tc>, window_params = [{transform_indices = @transform_0, window_bounds = array<i64: 256, 147>}, {transform_indices = @transform_1, window_bounds = array<i64: 147, 64>}, {transform_indices = @transform_2, window_bounds = array<i64: 256, 64>}, {transform_indices = @transform_3, window_bounds = array<i64: 1, 8, 64>}, {transform_indices = @transform_4, window_bounds = array<i64: 1, 8, 64>}]} {
    %c0_i32 = arith.constant 0 : i32
    %0 = arith.cmpi eq, %arg2, %c0_i32 : i32
    %1 = arith.extui %0 : i1 to i32
    %c0_i32_0 = arith.constant 0 : i32
    %2 = arith.cmpi ne, %1, %c0_i32_0 : i32
    scf.if %2 {
      %cst_10 = arith.constant 0.000000e+00 : f32
      %12 = vector.broadcast %cst_10 : f32 to vector<256x64xf32>
      %c0_11 = arith.constant 0 : index
      %c0_12 = arith.constant 0 : index
      %13 = vector.load %arg8[%c0_11, %c0_12] : memref<256x64xf32, #tpu.memory_space<vmem>>, vector<256x64xf32>
      tpu.vector_store %arg8[%c0_11, %c0_12], %12 {strides = array<i32>} : memref<256x64xf32, #tpu.memory_space<vmem>>, vector<256x64xf32>,
    } else {
    }
    %c0 = arith.constant 0 : index
    %c0_1 = arith.constant 0 : index
    %3 = vector.load %arg8[%c0, %c0_1] : memref<256x64xf32, #tpu.memory_space<vmem>>, vector<256x64xf32>
    %c0_2 = arith.constant 0 : index
    %c0_3 = arith.constant 0 : index
    %4 = vector.load %arg3[%c0_2, %c0_3] : memref<256x147xbf16, #tpu.memory_space<vmem>>, vector<256x147xbf16>
    %c0_4 = arith.constant 0 : index
    %c0_5 = arith.constant 0 : index
    %5 = vector.load %arg4[%c0_4, %c0_5] : memref<147x64xbf16, #tpu.memory_space<vmem>>, vector<147x64xbf16>
    %cst = arith.constant dense<0.000000e+00> : vector<256x64xf32>
    %6 = tpu.matmul %4, %5, %cst {dimension_numbers = #tpu.dot_dimension_numbers<[1], [0], [0], [1], [0, 0, 1, 1], [], []>} : vector<256x147xbf16>, vector<147x64xbf16>, vector<256x64xf32> -> vector<256x64xf32>
    %7 = arith.addf %3, %6 : vector<256x64xf32>
    %c0_6 = arith.constant 0 : index
    %c0_7 = arith.constant 0 : index
    %8 = vector.load %arg8[%c0_6, %c0_7] : memref<256x64xf32, #tpu.memory_space<vmem>>, vector<256x64xf32>
    tpu.vector_store %arg8[%c0_6, %c0_7], %7 {strides = array<i32>} : memref<256x64xf32, #tpu.memory_space<vmem>>, vector<256x64xf32>,
    %c0_i32_8 = arith.constant 0 : i32
    %9 = arith.cmpi eq, %arg2, %c0_i32_8 : i32
    %10 = arith.extui %9 : i1 to i32
    %c0_i32_9 = arith.constant 0 : i32
    %11 = arith.cmpi ne, %10, %c0_i32_9 : i32
    scf.if %11 {
      %c0_10 = arith.constant 0 : index
      %c0_11 = arith.constant 0 : index
      %12 = vector.load %arg8[%c0_10, %c0_11] : memref<256x64xf32, #tpu.memory_space<vmem>>, vector<256x64xf32>
      %13 = arith.truncf %12 : vector<256x64xf32> to vector<256x64xbf16>
      %c0_12 = arith.constant 0 : index
      %c0_13 = arith.constant 0 : index
      %14 = vector.load %arg5[%c0_12, %c0_13] : memref<256x64xbf16, #tpu.memory_space<vmem>>, vector<256x64xbf16>
      tpu.vector_store %arg5[%c0_12, %c0_13], %13 {strides = array<i32>} : memref<256x64xbf16, #tpu.memory_space<vmem>>, vector<256x64xbf16>,
      %cst_14 = arith.constant dense<0.000000e+00> : vector<64xf32>
      %15 = vector.multi_reduction <add>, %12, %cst_14 [0] : vector<256x64xf32> to vector<64xf32>
      %16 = vector.shape_cast %15 : vector<64xf32> to vector<1x64xf32>
      %17 = arith.mulf %12, %12 : vector<256x64xf32>
      %cst_15 = arith.constant dense<0.000000e+00> : vector<64xf32>
      %18 = vector.multi_reduction <add>, %17, %cst_15 [0] : vector<256x64xf32> to vector<64xf32>
      %19 = vector.shape_cast %18 : vector<64xf32> to vector<1x64xf32>
      %20 = vector.shape_cast %16 : vector<1x64xf32> to vector<1x1x64xf32>
      %21 = vector.broadcast %20 : vector<1x1x64xf32> to vector<1x8x64xf32>
      %c0_16 = arith.constant 0 : index
      %c0_17 = arith.constant 0 : index
      %c0_18 = arith.constant 0 : index
      %22 = vector.load %arg6[%c0_16, %c0_17, %c0_18] : memref<1x8x64xf32, #tpu.memory_space<vmem>>, vector<1x8x64xf32>
      tpu.vector_store %arg6[%c0_16, %c0_17, %c0_18], %21 {strides = array<i32>} : memref<1x8x64xf32, #tpu.memory_space<vmem>>, vector<1x8x64xf32>,
      %23 = vector.shape_cast %19 : vector<1x64xf32> to vector<1x1x64xf32>
      %24 = vector.broadcast %23 : vector<1x1x64xf32> to vector<1x8x64xf32>
      %c0_19 = arith.constant 0 : index
      %c0_20 = arith.constant 0 : index
      %c0_21 = arith.constant 0 : index
      %25 = vector.load %arg7[%c0_19, %c0_20, %c0_21] : memref<1x8x64xf32, #tpu.memory_space<vmem>>, vector<1x8x64xf32>
      tpu.vector_store %arg7[%c0_19, %c0_20, %c0_21], %24 {strides = array<i32>} : memref<1x8x64xf32, #tpu.memory_space<vmem>>, vector<1x8x64xf32>,
    } else {
    }
    return
  }
  func.func @transform_0(%arg0: i32, %arg1: i32, %arg2: i32) -> (i32, i32) {
    %c0_i32 = arith.constant 0 : i32
    return %arg0, %arg2 : i32, i32
  }
  func.func @transform_1(%arg0: i32, %arg1: i32, %arg2: i32) -> (i32, i32) {
    %c0_i32 = arith.constant 0 : i32
    return %arg2, %arg1 : i32, i32
  }
  func.func @transform_2(%arg0: i32, %arg1: i32, %arg2: i32) -> (i32, i32) {
    %c0_i32 = arith.constant 0 : i32
    return %arg0, %arg1 : i32, i32
  }
  func.func @transform_3(%arg0: i32, %arg1: i32, %arg2: i32) -> (i32, i32, i32) {
    %c0_i32 = arith.constant 0 : i32
    %c0_i32_0 = arith.constant 0 : i32
    return %arg0, %c0_i32, %arg1 : i32, i32, i32
  }
  func.func @transform_4(%arg0: i32, %arg1: i32, %arg2: i32) -> (i32, i32, i32) {
    %c0_i32 = arith.constant 0 : i32
    %c0_i32_0 = arith.constant 0 : i32
    return %arg0, %c0_i32, %arg1 : i32, i32, i32
  }
}

</mosaic_0001>

<llo_original>
// kernel: tpu_custom_call.1
$region0: #{tpu_custom_call.1}
  #allocation0 [shape = 'u32[]', space=smem, size = 0x4, offset = 0x4, fixed_abs, tag = 'smem constant byte address 0x4 - core index']
  #allocation1 [shape = 'u32[72,128]{1,0:T(1,128)}', space=vmem, size = 0x9000, scoped, tag = 'internal scratch']
  #allocation2 [shape = 'f32[256,64]{1,0:T(8,128)}', space=vmem, size = 0x20000, scoped, tag = 'scratch operand']
  %s0 = inlined_call_operand.vmem [shape: bf16[512,147], index: 0, kind: input, shape index: {}]
  %s1 = inlined_call_operand.vmem [shape: bf16[147,64], index: 1, kind: input, shape index: {}]
  %s2 = inlined_call_operand.vmem [shape: bf16[512,64], index: 2, kind: output, shape index: {0}]
  %s3 = inlined_call_operand.hbm [shape: f32[2,8,64], index: 3, kind: output, shape index: {1}]
  %s4 = inlined_call_operand.hbm [shape: f32[2,8,64], index: 4, kind: output, shape index: {2}]
  %5 = xla_tuple %s2, %s3, %s4
  %s6 = sld [smem:[#allocation0]]
  $region65: #{tpu_custom_call.1} parent=0
    _
  %s8 = ssub.s32 1, %s6
  %s9 = scalar_select 0, %s8, %s6
  $region1: #{tpu_custom_call.1} parent=0
    #allocation3 [shape = 'u8[8192]{0}', space=vmem, size = 0x2000, scoped, tag = 'output window, operand 1']
    #allocation4 [shape = 's32[2]{0}', space=sflag, size = 0x8, scoped, tag = 'scoped memory for tpu_custom_call.1']
    #allocation5 [shape = 'u8[8192]{0}', space=vmem, size = 0x2000, scoped, tag = 'output window, operand 2']
    #allocation6 [shape = 's32[2]{0}', space=sflag, size = 0x8, scoped, tag = 'scoped memory for tpu_custom_call.1']
    %10 = vsyncpa [#allocation4], 0
    %s11 = scalar_lea.sflag [#allocation4], 1
    %12 = vsyncpa %s11, 0
    %13 = vsyncpa [#allocation6], 0
    %s14 = scalar_lea.sflag [#allocation6], 1
    %15 = vsyncpa %s14, 0
    loop: start=0, step=1, limit=4
    $region2: #{tpu_custom_call.1} parent=1 // loop_pre_header
      _
    $region3: #{tpu_custom_call.1} parent=1 // loop_header
      %s17 = sphi 0, %s21
      %p18 = scmp.ge.s32.totalorder %s17, 4
      %s24 = sphi 0, %s43
      %s25 = sphi 0, %s39
      %s26 = sphi 0, %s35
      %s27 = sphi 0, %s24
      %s28 = sphi 0, %s25
      %s29 = sphi 0, %s26
      %s30 = sphi 0, %s27
      %s31 = sphi 0, %s28
      %s32 = sphi 0, %s29
      %s48 = sphi 0, %s50
      %s51 = sphi 0, %s48
      %s52 = sphi 0, %s51
      %s68 = sphi 0, %s52
      %s76 = sphi 0, %s78
      %s79 = sphi 0, %s76
      %s80 = sphi 0, %s79
      %s96 = sphi 0, %s80
      %s104 = sphi 0, %s106
      %s107 = sphi 0, %s104
      %s108 = sphi 0, %s107
      %s124 = sphi 0, %s108
      %s132 = sphi 0, %s134
      %s135 = sphi 0, %s132
      %s136 = sphi 0, %s135
      %s152 = sphi 0, %s136
      %s160 = sphi 0, %s162
      %s163 = sphi 0, %s160
      %s164 = sphi 0, %s163
      %s180 = sphi 0, %s164
    $region4: #{tpu_custom_call.1} parent=1 // loop_header_branch
      %20 = sbr.rel (%p18) target = $region8
    $region5: #{tpu_custom_call.1} parent=1 // loop_body
      %s22 = ssub.s32 %s17, 1
      %s23 = ssub.s32 %s17, 2
      %s33 = sadd.s32 1, %s26
      %p34 = scmp.ge.s32.totalorder %s33, 1
      %s35 = scalar_select %p34, 0, %s33
      %s36 = sadd.s32 1, %s25
      %s37 = scalar_select %p34, %s36, %s25
      %p38 = scmp.ge.s32.totalorder %s37, 1
      %s39 = scalar_select %p38, 0, %s37
      %s40 = sadd.s32 1, %s24
      %s41 = scalar_select %p38, %s40, %s24
      %p42 = scmp.ge.s32.totalorder %s41, 2
      %s43 = scalar_select %p42, 0, %s41
      %s44 = ssub.s32 %s24, %s43
      %s45 = ssub.s32 %s26, %s35
      %s46 = sor.u32 %s44, %s45
      %p47 = scmp.eq.s32.totalorder %s46, 0
      %s49 = sadd.s32 %s48, 1
      %s50 = scalar_select %p47, %s48, %s49
      %p53 = pneg %p47
      %p54 = scmp.eq.s32.totalorder %s17, 1
      %p55 = por %p53, %p54
      %p56 = scmp.ne.s32.totalorder %s48, %s51
      %p57 = scmp.eq.s32.totalorder %s17, 0
      %p58 = por %p56, %p57
      %p59 = scmp.ne.s32.totalorder %s48, %s51
      %p60 = scmp.eq.s32.totalorder %s22, 1
      %p61 = por %p59, %p60
      %p62 = scmp.ne.s32.totalorder %s51, %s52
      %p63 = scmp.eq.s32.totalorder %s22, 0
      %p64 = por %p62, %p63
      %p65 = scmp.ne.s32.totalorder %s51, %s52
      %p66 = scmp.eq.s32.totalorder %s23, 1
      %p67 = por %p65, %p66
      %p69 = scmp.ne.s32.totalorder %s52, %s68
      %p70 = scmp.eq.s32.totalorder %s23, 0
      %p71 = por %p69, %p70
      %s72 = ssub.s32 %s26, %s35
      %s73 = ssub.s32 %s25, %s39
      %s74 = sor.u32 %s72, %s73
      %p75 = scmp.eq.s32.totalorder %s74, 0
      %s77 = sadd.s32 %s76, 1
      %s78 = scalar_select %p75, %s76, %s77
      %p81 = pneg %p75
      %p82 = scmp.eq.s32.totalorder %s17, 1
      %p83 = por %p81, %p82
      %p84 = scmp.ne.s32.totalorder %s76, %s79
      %p85 = scmp.eq.s32.totalorder %s17, 0
      %p86 = por %p84, %p85
      %p87 = scmp.ne.s32.totalorder %s76, %s79
      %p88 = scmp.eq.s32.totalorder %s22, 1
      %p89 = por %p87, %p88
      %p90 = scmp.ne.s32.totalorder %s79, %s80
      %p91 = scmp.eq.s32.totalorder %s22, 0
      %p92 = por %p90, %p91
      %p93 = scmp.ne.s32.totalorder %s79, %s80
      %p94 = scmp.eq.s32.totalorder %s23, 1
      %p95 = por %p93, %p94
      %p97 = scmp.ne.s32.totalorder %s80, %s96
      %p98 = scmp.eq.s32.totalorder %s23, 0
      %p99 = por %p97, %p98
      %s100 = ssub.s32 %s24, %s43
      %s101 = ssub.s32 %s25, %s39
      %s102 = sor.u32 %s100, %s101
      %p103 = scmp.eq.s32.totalorder %s102, 0
      %s105 = sadd.s32 %s104, 1
      %s106 = scalar_select %p103, %s104, %s105
      %p109 = pneg %p103
      %p110 = scmp.eq.s32.totalorder %s17, 1
      %p111 = por %p109, %p110
      %p112 = scmp.ne.s32.totalorder %s104, %s107
      %p113 = scmp.eq.s32.totalorder %s17, 0
      %p114 = por %p112, %p113
      %p115 = scmp.ne.s32.totalorder %s104, %s107
      %p116 = scmp.eq.s32.totalorder %s22, 1
      %p117 = por %p115, %p116
      %p118 = scmp.ne.s32.totalorder %s107, %s108
      %p119 = scmp.eq.s32.totalorder %s22, 0
      %p120 = por %p118, %p119
      %p121 = scmp.ne.s32.totalorder %s107, %s108
      %p122 = scmp.eq.s32.totalorder %s23, 1
      %p123 = por %p121, %p122
      %p125 = scmp.ne.s32.totalorder %s108, %s124
      %p126 = scmp.eq.s32.totalorder %s23, 0
      %p127 = por %p125, %p126
      %s128 = ssub.s32 %s24, %s43
      %s129 = ssub.s32 %s25, %s39
      %s130 = sor.u32 %s128, %s129
      %p131 = scmp.eq.s32.totalorder %s130, 0
      %s133 = sadd.s32 %s132, 1
      %s134 = scalar_select %p131, %s132, %s133
      %p137 = pneg %p131
      %p138 = scmp.eq.s32.totalorder %s17, 1
      %p139 = por %p137, %p138
      %p140 = scmp.ne.s32.totalorder %s132, %s135
      %p141 = scmp.eq.s32.totalorder %s17, 0
      %p142 = por %p140, %p141
      %p143 = scmp.ne.s32.totalorder %s132, %s135
      %p144 = scmp.eq.s32.totalorder %s22, 1
      %p145 = por %p143, %p144
      %p146 = scmp.ne.s32.totalorder %s135, %s136
      %p147 = scmp.eq.s32.totalorder %s22, 0
      %p148 = por %p146, %p147
      %p149 = scmp.ne.s32.totalorder %s135, %s136
      %p150 = scmp.eq.s32.totalorder %s23, 1
      %p151 = por %p149, %p150
      %p153 = scmp.ne.s32.totalorder %s136, %s152
      %p154 = scmp.eq.s32.totalorder %s23, 0
      %p155 = por %p153, %p154
      %s156 = ssub.s32 %s24, %s43
      %s157 = ssub.s32 %s25, %s39
      %s158 = sor.u32 %s156, %s157
      %p159 = scmp.eq.s32.totalorder %s158, 0
      %s161 = sadd.s32 %s160, 1
      %s162 = scalar_select %p159, %s160, %s161
      %p165 = pneg %p159
      %p166 = scmp.eq.s32.totalorder %s17, 1
      %p167 = por %p165, %p166
      %p168 = scmp.ne.s32.totalorder %s160, %s163
      %p169 = scmp.eq.s32.totalorder %s17, 0
      %p170 = por %p168, %p169
      %p171 = scmp.ne.s32.totalorder %s160, %s163
      %p172 = scmp.eq.s32.totalorder %s22, 1
      %p173 = por %p171, %p172
      %p174 = scmp.ne.s32.totalorder %s163, %s164
      %p175 = scmp.eq.s32.totalorder %s22, 0
      %p176 = por %p174, %p175
      %p177 = scmp.ne.s32.totalorder %s163, %s164
      %p178 = scmp.eq.s32.totalorder %s23, 1
      %p179 = por %p177, %p178
      %p181 = scmp.ne.s32.totalorder %s164, %s180
      %p182 = scmp.eq.s32.totalorder %s23, 0
      %p183 = por %p181, %p182
      %p184 = scmp.le.s32.totalorder 1, %s17
      %p185 = scmp.lt.s32.totalorder %s17, 3
      %p186 = pnand %p184, %p185
      %p187 = pneg %p186
      // Predicated region
      $region9: #{tpu_custom_call.1} parent=5 // pred_check
        _
      $region10: #{tpu_custom_call.1} parent=5 // pred_check_branch
        %189 = sbr.rel (%p186) target = $region12
      $region11: #{tpu_custom_call.1} parent=5 // pred_region
        %s190 = ssub.s32 %s17, 1
        // Predicated region
        $region13: #{tpu_custom_call.1} parent=11 // pred_check
          %p191 = pneg %p92
        $region14: #{tpu_custom_call.1} parent=11 // pred_check_branch
          %193 = sbr.rel (%p191) target = $region16
        $region15: #{tpu_custom_call.1} parent=11 // pred_region
          %s194 = smul.u32 19, %s29
          %p195 = scmp.lt.s32.totalorder %s194, 18
          %s196 = scalar_select %p195, %s194, 18
          %p197 = scmp.lt.s32.totalorder %s28, 0
          %s198 = scalar_select %p197, %s28, 0
          %s199 = sadd.s32 %s198, %s196
          %s200 = smul.addr %s199, 4
          %s201 = scalar_lea.vmem %s1, %s200
          %s202 = smul.u32 19, %s29
        $region16: #{tpu_custom_call.1} parent=11 // pred_fallthru
          _
      $region12: #{tpu_custom_call.1} parent=5 // pred_fallthru
        _
      %p203 = scmp.lt.s32.totalorder %s17, 2
      // Predicated region
      $region17: #{tpu_custom_call.1} parent=5 // pred_check
        %p204 = pneg %p203
      $region18: #{tpu_custom_call.1} parent=5 // pred_check_branch
        %206 = sbr.rel (%p204) target = $region20
      $region19: #{tpu_custom_call.1} parent=5 // pred_region
        // Predicated region
        $region21: #{tpu_custom_call.1} parent=19 // pred_check
          %p207 = pneg %p58
        $region22: #{tpu_custom_call.1} parent=19 // pred_check_branch
          %209 = sbr.rel (%p207) target = $region24
        $region23: #{tpu_custom_call.1} parent=19 // pred_region
          %s210 = smul.u32 32, %s24
          %s211 = smul.u32 2, %s26
          %p212 = scmp.lt.s32.totalorder %s210, 63
          %s213 = scalar_select %p212, %s210, 63
          %p214 = scmp.lt.s32.totalorder %s211, 1
          %s215 = scalar_select %p214, %s211, 1
          %s216 = smul.addr %s213, 2
          %s217 = sadd.s32 %s215, %s216
          %s218 = smul.addr %s217, 4
          %s219 = scalar_lea.vmem %s0, %s218
          %s220 = smul.u32 32, %s24
          %s221 = smul.u32 2, %s26
        $region24: #{tpu_custom_call.1} parent=19 // pred_fallthru
          _
      $region20: #{tpu_custom_call.1} parent=5 // pred_fallthru
        _
      %p222 = scmp.le.s32.totalorder 1, %s17
      %p223 = scmp.lt.s32.totalorder %s17, 3
      %p224 = pnand %p222, %p223
      %p225 = pneg %p224
      // Predicated region
      $region25: #{tpu_custom_call.1} parent=5 // pred_check
        _
      $region26: #{tpu_custom_call.1} parent=5 // pred_check_branch
        %227 = sbr.rel (%p224) target = $region28
      $region27: #{tpu_custom_call.1} parent=5 // pred_region
        %s228 = ssub.s32 %s17, 1
        %s229 = smul.u32 32, %s27
        %s230 = smul.u32 2, %s29
        %p231 = scmp.lt.s32.totalorder %s229, 63
        %s232 = scalar_select %p231, %s229, 63
        %p233 = scmp.lt.s32.totalorder %s230, 1
        %s234 = scalar_select %p233, %s230, 1
        %s235 = smul.addr %s232, 2
        %s236 = sadd.s32 %s234, %s235
        %s237 = smul.addr %s236, 4
        %s238 = scalar_lea.vmem %s0, %s237
        %p239 = pneg %p64
        %p240 = pneg %p61
        %s241 = smul.u32 19, %s29
        %p242 = scmp.lt.s32.totalorder %s241, 18
        %s243 = scalar_select %p242, %s241, 18
        %p244 = scmp.lt.s32.totalorder %s28, 0
        %s245 = scalar_select %p244, %s28, 0
        %s246 = sadd.s32 %s245, %s243
        %s247 = smul.addr %s246, 4
        %s248 = scalar_lea.vmem %s1, %s247
        %p249 = pneg %p92
        %p250 = pneg %p89
        %p251 = pneg %p120
        %p252 = pneg %p117
        %s253 = smul.u32 32, %s27
        %p254 = scmp.lt.s32.totalorder %s253, 63
        %s255 = scalar_select %p254, %s253, 63
        %p256 = scmp.lt.s32.totalorder %s28, 0
        %s257 = scalar_select %p256, %s28, 0
        %s258 = sadd.s32 %s257, %s255
        %s259 = smul.addr %s258, 4
        %s260 = scalar_lea.vmem %s2, %s259
        %p261 = pneg %p148
        %p262 = pneg %p145
        %s263 = sand.u32 %s135, 1
        %s264 = scalar_lea.sflag [#allocation4], %s263
        %s265 = sand.u32 %s135, 1
        %s266 = smul.addr %s265, 8
        %s267 = scalar_lea.vmem [#allocation3], %s266
        %p268 = pneg %p176
        %p269 = pneg %p173
        %s270 = sand.u32 %s163, 1
        %s271 = scalar_lea.sflag [#allocation6], %s270
        %s272 = sand.u32 %s163, 1
        %s273 = smul.addr %s272, 8
        %s274 = scalar_lea.vmem [#allocation5], %s273
        %s275 = smul.u32 32, %s27
        %s276 = smul.u32 2, %s29
        %p277 = scmp.lt.s32.totalorder %s275, 63
        %s278 = scalar_select %p277, %s275, 63
        %p279 = scmp.lt.s32.totalorder %s276, 1
        %s280 = scalar_select %p279, %s276, 1
        %s281 = smul.addr %s278, 2
        %s282 = sadd.s32 %s280, %s281
        %s283 = smul.addr %s282, 4
        %s284 = scalar_lea.vmem %s0, %s283
        %s285 = smul.u32 32, %s27
        %s286 = smul.u32 2, %s29
        %s287 = smul.u32 19, %s29
        %p288 = scmp.lt.s32.totalorder %s287, 18
        %s289 = scalar_select %p288, %s287, 18
        %p290 = scmp.lt.s32.totalorder %s28, 0
        %s291 = scalar_select %p290, %s28, 0
        %s292 = sadd.s32 %s291, %s289
        %s293 = smul.addr %s292, 4
        %s294 = scalar_lea.vmem %s1, %s293
        %s295 = smul.u32 19, %s29
        %s296 = smul.u32 32, %s27
        %p297 = scmp.lt.s32.totalorder %s296, 63
        %s298 = scalar_select %p297, %s296, 63
        %p299 = scmp.lt.s32.totalorder %s28, 0
        %s300 = scalar_select %p299, %s28, 0
        %s301 = sadd.s32 %s300, %s298
        %s302 = smul.addr %s301, 4
        %s303 = scalar_lea.vmem %s2, %s302
        %s304 = smul.u32 32, %s27
        %p306 = scmp.eq.s32.totalorder %s29, 0
        // Predicated region
        $region29: #{tpu_custom_call.1} parent=27 // pred_check
          %p307 = pneg %p306
        $region30: #{tpu_custom_call.1} parent=27 // pred_check_branch
          %309 = sbr.rel (%p307) target = $region32
        $region31: #{tpu_custom_call.1} parent=27 // pred_region
          %vm310 = vcmask 523264
          %311 = vst.msk [vmem:[#allocation2] sm:$0xff] %vm310, 0.0
          %312 = vst.msk [vmem:[#allocation2 + $0x8] sm:$0xff] %vm310, 0.0
          %313 = vst.msk [vmem:[#allocation2 + $0x10] sm:$0xff] %vm310, 0.0
          %314 = vst.msk [vmem:[#allocation2 + $0x18] sm:$0xff] %vm310, 0.0
          %315 = vst.msk [vmem:[#allocation2 + $0x20] sm:$0xff] %vm310, 0.0
          %316 = vst.msk [vmem:[#allocation2 + $0x28] sm:$0xff] %vm310, 0.0
          %317 = vst.msk [vmem:[#allocation2 + $0x30] sm:$0xff] %vm310, 0.0
          %318 = vst.msk [vmem:[#allocation2 + $0x38] sm:$0xff] %vm310, 0.0
          %319 = vst.msk [vmem:[#allocation2 + $0x40] sm:$0xff] %vm310, 0.0
          %320 = vst.msk [vmem:[#allocation2 + $0x48] sm:$0xff] %vm310, 0.0
          %321 = vst.msk [vmem:[#allocation2 + $0x50] sm:$0xff] %vm310, 0.0
          %322 = vst.msk [vmem:[#allocation2 + $0x58] sm:$0xff] %vm310, 0.0
          %323 = vst.msk [vmem:[#allocation2 + $0x60] sm:$0xff] %vm310, 0.0
          %324 = vst.msk [vmem:[#allocation2 + $0x68] sm:$0xff] %vm310, 0.0
          %325 = vst.msk [vmem:[#allocation2 + $0x70] sm:$0xff] %vm310, 0.0
          %326 = vst.msk [vmem:[#allocation2 + $0x78] sm:$0xff] %vm310, 0.0
          %327 = vst.msk [vmem:[#allocation2 + $0x80] sm:$0xff] %vm310, 0.0
          %328 = vst.msk [vmem:[#allocation2 + $0x88] sm:$0xff] %vm310, 0.0
          %329 = vst.msk [vmem:[#allocation2 + $0x90] sm:$0xff] %vm310, 0.0
          %330 = vst.msk [vmem:[#allocation2 + $0x98] sm:$0xff] %vm310, 0.0
          %331 = vst.msk [vmem:[#allocation2 + $0xa0] sm:$0xff] %vm310, 0.0
          %332 = vst.msk [vmem:[#allocation2 + $0xa8] sm:$0xff] %vm310, 0.0
          %333 = vst.msk [vmem:[#allocation2 + $0xb0] sm:$0xff] %vm310, 0.0
          %334 = vst.msk [vmem:[#allocation2 + $0xb8] sm:$0xff] %vm310, 0.0
          %335 = vst.msk [vmem:[#allocation2 + $0xc0] sm:$0xff] %vm310, 0.0
          %336 = vst.msk [vmem:[#allocation2 + $0xc8] sm:$0xff] %vm310, 0.0
          %337 = vst.msk [vmem:[#allocation2 + $0xd0] sm:$0xff] %vm310, 0.0
          %338 = vst.msk [vmem:[#allocation2 + $0xd8] sm:$0xff] %vm310, 0.0
          %339 = vst.msk [vmem:[#allocation2 + $0xe0] sm:$0xff] %vm310, 0.0
          %340 = vst.msk [vmem:[#allocation2 + $0xe8] sm:$0xff] %vm310, 0.0
          %341 = vst.msk [vmem:[#allocation2 + $0xf0] sm:$0xff] %vm310, 0.0
          %342 = vst.msk [vmem:[#allocation2 + $0xf8] sm:$0xff] %vm310, 0.0
        $region32: #{tpu_custom_call.1} parent=27 // pred_fallthru
          _
        %v343 = vld [vmem:[#allocation2] sm:$0xff]
        %v344 = vld [vmem:[#allocation2 + $0x8] sm:$0xff]
        %v345 = vld [vmem:[#allocation2 + $0x10] sm:$0xff]
        %v346 = vld [vmem:[#allocation2 + $0x18] sm:$0xff]
        %v347 = vld [vmem:[#allocation2 + $0x20] sm:$0xff]
        %v348 = vld [vmem:[#allocation2 + $0x28] sm:$0xff]
        %v349 = vld [vmem:[#allocation2 + $0x30] sm:$0xff]
        %v350 = vld [vmem:[#allocation2 + $0x38] sm:$0xff]
        %v351 = vld [vmem:[#allocation2 + $0x40] sm:$0xff]
        %v352 = vld [vmem:[#allocation2 + $0x48] sm:$0xff]
        %v353 = vld [vmem:[#allocation2 + $0x50] sm:$0xff]
        %v354 = vld [vmem:[#allocation2 + $0x58] sm:$0xff]
        %v355 = vld [vmem:[#allocation2 + $0x60] sm:$0xff]
        %v356 = vld [vmem:[#allocation2 + $0x68] sm:$0xff]
        %v357 = vld [vmem:[#allocation2 + $0x70] sm:$0xff]
        %v358 = vld [vmem:[#allocation2 + $0x78] sm:$0xff]
        %v359 = vld [vmem:[#allocation2 + $0x80] sm:$0xff]
        %v360 = vld [vmem:[#allocation2 + $0x88] sm:$0xff]
        %v361 = vld [vmem:[#allocation2 + $0x90] sm:$0xff]
        %v362 = vld [vmem:[#allocation2 + $0x98] sm:$0xff]
        %v363 = vld [vmem:[#allocation2 + $0xa0] sm:$0xff]
        %v364 = vld [vmem:[#allocation2 + $0xa8] sm:$0xff]
        %v365 = vld [vmem:[#allocation2 + $0xb0] sm:$0xff]
        %v366 = vld [vmem:[#allocation2 + $0xb8] sm:$0xff]
        %v367 = vld [vmem:[#allocation2 + $0xc0] sm:$0xff]
        %v368 = vld [vmem:[#allocation2 + $0xc8] sm:$0xff]
        %v369 = vld [vmem:[#allocation2 + $0xd0] sm:$0xff]
        %v370 = vld [vmem:[#allocation2 + $0xd8] sm:$0xff]
        %v371 = vld [vmem:[#allocation2 + $0xe0] sm:$0xff]
        %v372 = vld [vmem:[#allocation2 + $0xe8] sm:$0xff]
        %v373 = vld [vmem:[#allocation2 + $0xf0] sm:$0xff]
        %v374 = vld [vmem:[#allocation2 + $0xf8] sm:$0xff]
        %v375 = vld [vmem:[%s284] sm:$0xff]
        %v376 = vld [vmem:[%s284 + $0x8] sm:$0xff]
        %v377 = vld [vmem:[%s284 + $0x10] sm:$0xff]
        %v378 = vld [vmem:[%s284 + $0x18] sm:$0xff]
        %v379 = vld [vmem:[%s284 + $0x20] sm:$0xff]
        %v380 = vld [vmem:[%s284 + $0x28] sm:$0xff]
        %v381 = vld [vmem:[%s284 + $0x30] sm:$0xff]
        %v382 = vld [vmem:[%s284 + $0x38] sm:$0xff]
        %v383 = vld [vmem:[%s284 + $0x40] sm:$0xff]
        %v384 = vld [vmem:[%s284 + $0x48] sm:$0xff]
        %v385 = vld [vmem:[%s284 + $0x50] sm:$0xff]
        %v386 = vld [vmem:[%s284 + $0x58] sm:$0xff]
        %v387 = vld [vmem:[%s284 + $0x60] sm:$0xff]
        %v388 = vld [vmem:[%s284 + $0x68] sm:$0xff]
        %v389 = vld [vmem:[%s284 + $0x70] sm:$0xff]
        %v390 = vld [vmem:[%s284 + $0x78] sm:$0xff]
        %v391 = vld [vmem:[%s284 + $0x80] sm:$0xff]
        %v392 = vld [vmem:[%s284 + $0x88] sm:$0xff]
        %v393 = vld [vmem:[%s284 + $0x90] sm:$0xff]
        %v394 = vld [vmem:[%s284 + $0x98] sm:$0xff]
        %v395 = vld [vmem:[%s284 + $0xa0] sm:$0xff]
        %v396 = vld [vmem:[%s284 + $0xa8] sm:$0xff]
        %v397 = vld [vmem:[%s284 + $0xb0] sm:$0xff]
        %v398 = vld [vmem:[%s284 + $0xb8] sm:$0xff]
        %v399 = vld [vmem:[%s284 + $0xc0] sm:$0xff]
        %v400 = vld [vmem:[%s284 + $0xc8] sm:$0xff]
        %v401 = vld [vmem:[%s284 + $0xd0] sm:$0xff]
        %v402 = vld [vmem:[%s284 + $0xd8] sm:$0xff]
        %v403 = vld [vmem:[%s284 + $0xe0] sm:$0xff]
        %v404 = vld [vmem:[%s284 + $0xe8] sm:$0xff]
        %v405 = vld [vmem:[%s284 + $0xf0] sm:$0xff]
        %v406 = vld [vmem:[%s284 + $0xf8] sm:$0xff]
        %v407 = vld [vmem:[%s294] sm:$0xf]
        %v408 = vld [vmem:[%s294 + $0x4] sm:$0xf]
        %v409 = vld [vmem:[%s294 + $0x8] sm:$0xf]
        %v410 = vld [vmem:[%s294 + $0xc] sm:$0xf]
        %v411 = vld [vmem:[%s294 + $0x10] sm:$0xf]
        %v412 = vld [vmem:[%s294 + $0x14] sm:$0xf]
        %v413 = vld [vmem:[%s294 + $0x18] sm:$0xf]
        %v414 = vld [vmem:[%s294 + $0x1c] sm:$0xf]
        %v415 = vld [vmem:[%s294 + $0x20] sm:$0xf]
        %v416 = vld [vmem:[%s294 + $0x24] sm:$0xf]
        %v417 = vld [vmem:[%s294 + $0x28] sm:$0xf]
        %v418 = vld [vmem:[%s294 + $0x2c] sm:$0xf]
        %v419 = vld [vmem:[%s294 + $0x30] sm:$0xf]
        %v420 = vld [vmem:[%s294 + $0x34] sm:$0xf]
        %v421 = vld [vmem:[%s294 + $0x38] sm:$0xf]
        %v422 = vld [vmem:[%s294 + $0x3c] sm:$0xf]
        %v423 = vld [vmem:[%s294 + $0x40] sm:$0xf]
        %v424 = vld [vmem:[%s294 + $0x44] sm:$0xf]
        %v425 = vld [vmem:[%s294 + $0x48] sm:$0x3]
        %v458 = vunpack.c.l.b16 %v375
        %v459 = vunpack.c.h.b16 %v375
        %v460 = vunpack.c.l.b16 %v376
        %v461 = vunpack.c.h.b16 %v376
        %v462 = vunpack.c.l.b16 %v377
        %v463 = vunpack.c.h.b16 %v377
        %v464 = vunpack.c.l.b16 %v378
        %v465 = vunpack.c.h.b16 %v378
        %v466 = vunpack.c.l.b16 %v379
        %v467 = vunpack.c.h.b16 %v379
        %v468 = vunpack.c.l.b16 %v380
        %v469 = vunpack.c.h.b16 %v380
        %v470 = vunpack.c.l.b16 %v381
        %v471 = vunpack.c.h.b16 %v381
        %v472 = vunpack.c.l.b16 %v382
        %v473 = vunpack.c.h.b16 %v382
        %v474 = vunpack.c.l.b16 %v383
        %v475 = vunpack.c.h.b16 %v383
        %v476 = vunpack.c.l.b16 %v384
        %v477 = vunpack.c.h.b16 %v384
        %v478 = vunpack.c.l.b16 %v385
        %v479 = vunpack.c.h.b16 %v385
        %v480 = vunpack.c.l.b16 %v386
        %v481 = vunpack.c.h.b16 %v386
        %v482 = vunpack.c.l.b16 %v387
        %v483 = vunpack.c.h.b16 %v387
        %v484 = vunpack.c.l.b16 %v388
        %v485 = vunpack.c.h.b16 %v388
        %v486 = vunpack.c.l.b16 %v389
        %v487 = vunpack.c.h.b16 %v389
        %v488 = vunpack.c.l.b16 %v390
        %v489 = vunpack.c.h.b16 %v390
        %v490 = vunpack.c.l.b16 %v391
        %v491 = vunpack.c.h.b16 %v391
        %v492 = vunpack.c.l.b16 %v392
        %v493 = vunpack.c.h.b16 %v392
        %v494 = vunpack.c.l.b16 %v393
        %v495 = vunpack.c.h.b16 %v393
        %v496 = vunpack.c.l.b16 %v394
        %v497 = vunpack.c.h.b16 %v394
        %v498 = vunpack.c.l.b16 %v395
        %v499 = vunpack.c.h.b16 %v395
        %v500 = vunpack.c.l.b16 %v396
        %v501 = vunpack.c.h.b16 %v396
        %v502 = vunpack.c.l.b16 %v397
        %v503 = vunpack.c.h.b16 %v397
        %v504 = vunpack.c.l.b16 %v398
        %v505 = vunpack.c.h.b16 %v398
        %v506 = vunpack.c.l.b16 %v399
        %v507 = vunpack.c.h.b16 %v399
        %v508 = vunpack.c.l.b16 %v400
        %v509 = vunpack.c.h.b16 %v400
        %v510 = vunpack.c.l.b16 %v401
        %v511 = vunpack.c.h.b16 %v401
        %v512 = vunpack.c.l.b16 %v402
        %v513 = vunpack.c.h.b16 %v402
        %v514 = vunpack.c.l.b16 %v403
        %v515 = vunpack.c.h.b16 %v403
        %v516 = vunpack.c.l.b16 %v404
        %v517 = vunpack.c.h.b16 %v404
        %v518 = vunpack.c.l.b16 %v405
        %v519 = vunpack.c.h.b16 %v405
        %v520 = vunpack.c.l.b16 %v406
        %v521 = vunpack.c.h.b16 %v406
        %v522 = vpack.c.b16 %v460, %v458
        %v523 = vpack.c.b16 %v461, %v459
        %v524 = vpack.c.b16 %v464, %v462
        %v525 = vpack.c.b16 %v465, %v463
        %v526 = vpack.c.b16 %v468, %v466
        %v527 = vpack.c.b16 %v469, %v467
        %v528 = vpack.c.b16 %v472, %v470
        %v529 = vpack.c.b16 %v473, %v471
        %v530 = vpack.c.b16 %v476, %v474
        %v531 = vpack.c.b16 %v477, %v475
        %v532 = vpack.c.b16 %v480, %v478
        %v533 = vpack.c.b16 %v481, %v479
        %v534 = vpack.c.b16 %v484, %v482
        %v535 = vpack.c.b16 %v485, %v483
        %v536 = vpack.c.b16 %v488, %v486
        %v537 = vpack.c.b16 %v489, %v487
        %v538 = vpack.c.b16 %v492, %v490
        %v539 = vpack.c.b16 %v493, %v491
        %v540 = vpack.c.b16 %v496, %v494
        %v541 = vpack.c.b16 %v497, %v495
        %v542 = vpack.c.b16 %v500, %v498
        %v543 = vpack.c.b16 %v501, %v499
        %v544 = vpack.c.b16 %v504, %v502
        %v545 = vpack.c.b16 %v505, %v503
        %v546 = vpack.c.b16 %v508, %v506
        %v547 = vpack.c.b16 %v509, %v507
        %v548 = vpack.c.b16 %v512, %v510
        %v549 = vpack.c.b16 %v513, %v511
        %v550 = vpack.c.b16 %v516, %v514
        %v551 = vpack.c.b16 %v517, %v515
        %v552 = vpack.c.b16 %v520, %v518
        %v553 = vpack.c.b16 %v521, %v519
        %v589 = vunpack.c.l.b16 %v407
        %v590 = vunpack.c.l.b16 %v408
        %v591 = vunpack.c.l.b16 %v409
        %v592 = vunpack.c.l.b16 %v410
        %v593 = vunpack.c.l.b16 %v411
        %v594 = vunpack.c.l.b16 %v412
        %v595 = vunpack.c.l.b16 %v413
        %v596 = vunpack.c.l.b16 %v414
        %v597 = vunpack.c.l.b16 %v415
        %v598 = vunpack.c.l.b16 %v416
        %v599 = vunpack.c.l.b16 %v417
        %v600 = vunpack.c.l.b16 %v418
        %v601 = vunpack.c.l.b16 %v419
        %v602 = vunpack.c.l.b16 %v420
        %v603 = vunpack.c.l.b16 %v421
        %v604 = vunpack.c.l.b16 %v422
        %v605 = vunpack.c.l.b16 %v423
        %v606 = vunpack.c.l.b16 %v424
        %v607 = vunpack.c.l.b16 %v425
        %v608 = vpack.c.b16 %v590, %v589
        %v609 = vpack.c.b16 %v592, %v591
        %v610 = vpack.c.b16 %v594, %v593
        %v611 = vpack.c.b16 %v596, %v595
        %v612 = vpack.c.b16 %v598, %v597
        %v613 = vpack.c.b16 %v600, %v599
        %v614 = vpack.c.b16 %v602, %v601
        %v615 = vpack.c.b16 %v604, %v603
        %v616 = vpack.c.b16 %v606, %v605
        %v617 = vpack.c.b16 %v607, %v607
        %vm627 = vcmask 154624
        %v629 = vsel %vm627, %v523, 0
        %v632 = vsel %vm627, %v525, 0
        %v635 = vsel %vm627, %v527, 0
        %v638 = vsel %vm627, %v529, 0
        %v641 = vsel %vm627, %v531, 0
        %v644 = vsel %vm627, %v533, 0
        %v647 = vsel %vm627, %v535, 0
        %v650 = vsel %vm627, %v537, 0
        %v653 = vsel %vm627, %v539, 0
        %v656 = vsel %vm627, %v541, 0
        %v659 = vsel %vm627, %v543, 0
        %v662 = vsel %vm627, %v545, 0
        %v665 = vsel %vm627, %v547, 0
        %v668 = vsel %vm627, %v549, 0
        %v671 = vsel %vm627, %v551, 0
        %v674 = vsel %vm627, %v553, 0
        %vm676 = vcmask 1040384
        %vm677 = vcmask 1041408
        %v678 = vsel %vm676, 4294967295, 65535
        %v679 = vsel %vm677, %v678, 0
        %v681 = vand.u32 %v617, %v679
        %683 = vmatpush.bf16.msra.mxu0 %v615
        %684 = vmatpush.bf16.msra.mxu0 %v614
        %685 = vmatpush.bf16.msra.mxu0 %v613
        %686 = vmatpush.bf16.msra.mxu0 %v612
        %687 = vmatpush.bf16.msra.mxu0 %v611
        %688 = vmatpush.bf16.msra.mxu0 %v610
        %689 = vmatpush.bf16.msra.mxu0 %v609
        %690 = vmatpush.bf16.msra.mxu0 %v608
        %691 = vmatmul.bf16.gmra.mxu0 %v522
        %v692 = vpop.f32.mrf.mxu0
        %v693 = vadd.f32 0.0, %v692
        %v694 = vpop.f32.mrf.mxu0
        %v695 = vadd.f32 0.0, %v694
        %696 = vmatmul.bf16.gmra.mxu0 %v524
        %v697 = vpop.f32.mrf.mxu0
        %v698 = vadd.f32 0.0, %v697
        %v699 = vpop.f32.mrf.mxu0
        %v700 = vadd.f32 0.0, %v699
        %701 = vmatmul.bf16.gmra.mxu0 %v526
        %v702 = vpop.f32.mrf.mxu0
        %v703 = vadd.f32 0.0, %v702
        %v704 = vpop.f32.mrf.mxu0
        %v705 = vadd.f32 0.0, %v704
        %706 = vmatmul.bf16.gmra.mxu0 %v528
        %v707 = vpop.f32.mrf.mxu0
        %v708 = vadd.f32 0.0, %v707
        %v709 = vpop.f32.mrf.mxu0
        %v710 = vadd.f32 0.0, %v709
        %711 = vmatmul.bf16.gmra.mxu0 %v530
        %v712 = vpop.f32.mrf.mxu0
        %v713 = vadd.f32 0.0, %v712
        %v714 = vpop.f32.mrf.mxu0
        %v715 = vadd.f32 0.0, %v714
        %716 = vmatmul.bf16.gmra.mxu0 %v532
        %v717 = vpop.f32.mrf.mxu0
        %v718 = vadd.f32 0.0, %v717
        %v719 = vpop.f32.mrf.mxu0
        %v720 = vadd.f32 0.0, %v719
        %721 = vmatmul.bf16.gmra.mxu0 %v534
        %v722 = vpop.f32.mrf.mxu0
        %v723 = vadd.f32 0.0, %v722
        %v724 = vpop.f32.mrf.mxu0
        %v725 = vadd.f32 0.0, %v724
        %726 = vmatmul.bf16.gmra.mxu0 %v536
        %v727 = vpop.f32.mrf.mxu0
        %v728 = vadd.f32 0.0, %v727
        %v729 = vpop.f32.mrf.mxu0
        %v730 = vadd.f32 0.0, %v729
        %731 = vmatmul.bf16.gmra.mxu0 %v538
        %v732 = vpop.f32.mrf.mxu0
        %v733 = vadd.f32 0.0, %v732
        %v734 = vpop.f32.mrf.mxu0
        %v735 = vadd.f32 0.0, %v734
        %736 = vmatmul.bf16.gmra.mxu0 %v540
        %v737 = vpop.f32.mrf.mxu0
        %v738 = vadd.f32 0.0, %v737
        %v739 = vpop.f32.mrf.mxu0
        %v740 = vadd.f32 0.0, %v739
        %741 = vmatmul.bf16.gmra.mxu0 %v542
        %v742 = vpop.f32.mrf.mxu0
        %v743 = vadd.f32 0.0, %v742
        %v744 = vpop.f32.mrf.mxu0
        %v745 = vadd.f32 0.0, %v744
        %746 = vmatmul.bf16.gmra.mxu0 %v544
        %v747 = vpop.f32.mrf.mxu0
        %v748 = vadd.f32 0.0, %v747
        %v749 = vpop.f32.mrf.mxu0
        %v750 = vadd.f32 0.0, %v749
        %751 = vmatmul.bf16.gmra.mxu0 %v546
        %v752 = vpop.f32.mrf.mxu0
        %v753 = vadd.f32 0.0, %v752
        %v754 = vpop.f32.mrf.mxu0
        %v755 = vadd.f32 0.0, %v754
        %756 = vmatmul.bf16.gmra.mxu0 %v548
        %v757 = vpop.f32.mrf.mxu0
        %v758 = vadd.f32 0.0, %v757
        %v759 = vpop.f32.mrf.mxu0
        %v760 = vadd.f32 0.0, %v759
        %761 = vmatmul.bf16.gmra.mxu0 %v550
        %v762 = vpop.f32.mrf.mxu0
        %v763 = vadd.f32 0.0, %v762
        %v764 = vpop.f32.mrf.mxu0
        %v765 = vadd.f32 0.0, %v764
        %766 = vmatmul.bf16.gmra.mxu0 %v552
        %v767 = vpop.f32.mrf.mxu0
        %v768 = vadd.f32 0.0, %v767
        %v769 = vpop.f32.mrf.mxu0
        %v770 = vadd.f32 0.0, %v769
        %771 = vdwg.mxu0
        %772 = vmatpush.bf16.msra.mxu0 0
        %773 = vmatpush.bf16.msra.mxu0 0
        %774 = vmatpush.bf16.msra.mxu0 0
        %775 = vmatpush.bf16.msra.mxu0 0
        %776 = vmatpush.bf16.msra.mxu0 0
        %777 = vmatpush.bf16.msra.mxu0 0
        %778 = vmatpush.bf16.msra.mxu0 %v681
        %779 = vmatpush.bf16.msra.mxu0 %v616
        %780 = vmatmul.bf16.gmra.mxu0 %v629
        %v781 = vpop.f32.mrf.mxu0
        %v782 = vadd.f32 %v693, %v781
        %v783 = vpop.f32.mrf.mxu0
        %v784 = vadd.f32 %v695, %v783
        %785 = vmatmul.bf16.gmra.mxu0 %v632
        %v786 = vpop.f32.mrf.mxu0
        %v787 = vadd.f32 %v698, %v786
        %v788 = vpop.f32.mrf.mxu0
        %v789 = vadd.f32 %v700, %v788
        %790 = vmatmul.bf16.gmra.mxu0 %v635
        %v791 = vpop.f32.mrf.mxu0
        %v792 = vadd.f32 %v703, %v791
        %v793 = vpop.f32.mrf.mxu0
        %v794 = vadd.f32 %v705, %v793
        %795 = vmatmul.bf16.gmra.mxu0 %v638
        %v796 = vpop.f32.mrf.mxu0
        %v797 = vadd.f32 %v708, %v796
        %v798 = vpop.f32.mrf.mxu0
        %v799 = vadd.f32 %v710, %v798
        %800 = vmatmul.bf16.gmra.mxu0 %v641
        %v801 = vpop.f32.mrf.mxu0
        %v802 = vadd.f32 %v713, %v801
        %v803 = vpop.f32.mrf.mxu0
        %v804 = vadd.f32 %v715, %v803
        %805 = vmatmul.bf16.gmra.mxu0 %v644
        %v806 = vpop.f32.mrf.mxu0
        %v807 = vadd.f32 %v718, %v806
        %v808 = vpop.f32.mrf.mxu0
        %v809 = vadd.f32 %v720, %v808
        %810 = vmatmul.bf16.gmra.mxu0 %v647
        %v811 = vpop.f32.mrf.mxu0
        %v812 = vadd.f32 %v723, %v811
        %v813 = vpop.f32.mrf.mxu0
        %v814 = vadd.f32 %v725, %v813
        %815 = vmatmul.bf16.gmra.mxu0 %v650
        %v816 = vpop.f32.mrf.mxu0
        %v817 = vadd.f32 %v728, %v816
        %v818 = vpop.f32.mrf.mxu0
        %v819 = vadd.f32 %v730, %v818
        %820 = vmatmul.bf16.gmra.mxu0 %v653
        %v821 = vpop.f32.mrf.mxu0
        %v822 = vadd.f32 %v733, %v821
        %v823 = vpop.f32.mrf.mxu0
        %v824 = vadd.f32 %v735, %v823
        %825 = vmatmul.bf16.gmra.mxu0 %v656
        %v826 = vpop.f32.mrf.mxu0
        %v827 = vadd.f32 %v738, %v826
        %v828 = vpop.f32.mrf.mxu0
        %v829 = vadd.f32 %v740, %v828
        %830 = vmatmul.bf16.gmra.mxu0 %v659
        %v831 = vpop.f32.mrf.mxu0
        %v832 = vadd.f32 %v743, %v831
        %v833 = vpop.f32.mrf.mxu0
        %v834 = vadd.f32 %v745, %v833
        %835 = vmatmul.bf16.gmra.mxu0 %v662
        %v836 = vpop.f32.mrf.mxu0
        %v837 = vadd.f32 %v748, %v836
        %v838 = vpop.f32.mrf.mxu0
        %v839 = vadd.f32 %v750, %v838
        %840 = vmatmul.bf16.gmra.mxu0 %v665
        %v841 = vpop.f32.mrf.mxu0
        %v842 = vadd.f32 %v753, %v841
        %v843 = vpop.f32.mrf.mxu0
        %v844 = vadd.f32 %v755, %v843
        %845 = vmatmul.bf16.gmra.mxu0 %v668
        %v846 = vpop.f32.mrf.mxu0
        %v847 = vadd.f32 %v758, %v846
        %v848 = vpop.f32.mrf.mxu0
        %v849 = vadd.f32 %v760, %v848
        %850 = vmatmul.bf16.gmra.mxu0 %v671
        %v851 = vpop.f32.mrf.mxu0
        %v852 = vadd.f32 %v763, %v851
        %v853 = vpop.f32.mrf.mxu0
        %v854 = vadd.f32 %v765, %v853
        %855 = vmatmul.bf16.gmra.mxu0 %v674
        %v856 = vpop.f32.mrf.mxu0
        %v857 = vadd.f32 %v768, %v856
        %v858 = vpop.f32.mrf.mxu0
        %v859 = vadd.f32 %v770, %v858
        %860 = vdwg.mxu0
        %v861 = vadd.f32 %v343, %v782
        %v862 = vadd.f32 %v344, %v784
        %v863 = vadd.f32 %v345, %v787
        %v864 = vadd.f32 %v346, %v789
        %v865 = vadd.f32 %v347, %v792
        %v866 = vadd.f32 %v348, %v794
        %v867 = vadd.f32 %v349, %v797
        %v868 = vadd.f32 %v350, %v799
        %v869 = vadd.f32 %v351, %v802
        %v870 = vadd.f32 %v352, %v804
        %v871 = vadd.f32 %v353, %v807
        %v872 = vadd.f32 %v354, %v809
        %v873 = vadd.f32 %v355, %v812
        %v874 = vadd.f32 %v356, %v814
        %v875 = vadd.f32 %v357, %v817
        %v876 = vadd.f32 %v358, %v819
        %v877 = vadd.f32 %v359, %v822
        %v878 = vadd.f32 %v360, %v824
        %v879 = vadd.f32 %v361, %v827
        %v880 = vadd.f32 %v362, %v829
        %v881 = vadd.f32 %v363, %v832
        %v882 = vadd.f32 %v364, %v834
        %v883 = vadd.f32 %v365, %v837
        %v884 = vadd.f32 %v366, %v839
        %v885 = vadd.f32 %v367, %v842
        %v886 = vadd.f32 %v368, %v844
        %v887 = vadd.f32 %v369, %v847
        %v888 = vadd.f32 %v370, %v849
        %v889 = vadd.f32 %v371, %v852
        %v890 = vadd.f32 %v372, %v854
        %v891 = vadd.f32 %v373, %v857
        %v892 = vadd.f32 %v374, %v859
        %vm893 = vcmask 523264
        %894 = vst.msk [vmem:[#allocation2] sm:$0xff] %vm893, %v861
        %895 = vst.msk [vmem:[#allocation2 + $0x8] sm:$0xff] %vm893, %v862
        %896 = vst.msk [vmem:[#allocation2 + $0x10] sm:$0xff] %vm893, %v863
        %897 = vst.msk [vmem:[#allocation2 + $0x18] sm:$0xff] %vm893, %v864
        %898 = vst.msk [vmem:[#allocation2 + $0x20] sm:$0xff] %vm893, %v865
        %899 = vst.msk [vmem:[#allocation2 + $0x28] sm:$0xff] %vm893, %v866
        %900 = vst.msk [vmem:[#allocation2 + $0x30] sm:$0xff] %vm893, %v867
        %901 = vst.msk [vmem:[#allocation2 + $0x38] sm:$0xff] %vm893, %v868
        %902 = vst.msk [vmem:[#allocation2 + $0x40] sm:$0xff] %vm893, %v869
        %903 = vst.msk [vmem:[#allocation2 + $0x48] sm:$0xff] %vm893, %v870
        %904 = vst.msk [vmem:[#allocation2 + $0x50] sm:$0xff] %vm893, %v871
        %905 = vst.msk [vmem:[#allocation2 + $0x58] sm:$0xff] %vm893, %v872
        %906 = vst.msk [vmem:[#allocation2 + $0x60] sm:$0xff] %vm893, %v873
        %907 = vst.msk [vmem:[#allocation2 + $0x68] sm:$0xff] %vm893, %v874
        %908 = vst.msk [vmem:[#allocation2 + $0x70] sm:$0xff] %vm893, %v875
        %909 = vst.msk [vmem:[#allocation2 + $0x78] sm:$0xff] %vm893, %v876
        %910 = vst.msk [vmem:[#allocation2 + $0x80] sm:$0xff] %vm893, %v877
        %911 = vst.msk [vmem:[#allocation2 + $0x88] sm:$0xff] %vm893, %v878
        %912 = vst.msk [vmem:[#allocation2 + $0x90] sm:$0xff] %vm893, %v879
        %913 = vst.msk [vmem:[#allocation2 + $0x98] sm:$0xff] %vm893, %v880
        %914 = vst.msk [vmem:[#allocation2 + $0xa0] sm:$0xff] %vm893, %v881
        %915 = vst.msk [vmem:[#allocation2 + $0xa8] sm:$0xff] %vm893, %v882
        %916 = vst.msk [vmem:[#allocation2 + $0xb0] sm:$0xff] %vm893, %v883
        %917 = vst.msk [vmem:[#allocation2 + $0xb8] sm:$0xff] %vm893, %v884
        %918 = vst.msk [vmem:[#allocation2 + $0xc0] sm:$0xff] %vm893, %v885
        %919 = vst.msk [vmem:[#allocation2 + $0xc8] sm:$0xff] %vm893, %v886
        %920 = vst.msk [vmem:[#allocation2 + $0xd0] sm:$0xff] %vm893, %v887
        %921 = vst.msk [vmem:[#allocation2 + $0xd8] sm:$0xff] %vm893, %v888
        %922 = vst.msk [vmem:[#allocation2 + $0xe0] sm:$0xff] %vm893, %v889
        %923 = vst.msk [vmem:[#allocation2 + $0xe8] sm:$0xff] %vm893, %v890
        %924 = vst.msk [vmem:[#allocation2 + $0xf0] sm:$0xff] %vm893, %v891
        %925 = vst.msk [vmem:[#allocation2 + $0xf8] sm:$0xff] %vm893, %v892
        // Predicated region
        $region33: #{tpu_custom_call.1} parent=27 // pred_check
          %p926 = pneg %p306
        $region34: #{tpu_custom_call.1} parent=27 // pred_check_branch
          %928 = sbr.rel (%p926) target = $region36
        $region35: #{tpu_custom_call.1} parent=27 // pred_region
          %v929 = vld [vmem:[#allocation2] sm:$0xff]
          %v930 = vld [vmem:[#allocation2 + $0x8] sm:$0xff]
          %v931 = vld [vmem:[#allocation2 + $0x10] sm:$0xff]
          %v932 = vld [vmem:[#allocation2 + $0x18] sm:$0xff]
          %v933 = vld [vmem:[#allocation2 + $0x20] sm:$0xff]
          %v934 = vld [vmem:[#allocation2 + $0x28] sm:$0xff]
          %v935 = vld [vmem:[#allocation2 + $0x30] sm:$0xff]
          %v936 = vld [vmem:[#allocation2 + $0x38] sm:$0xff]
          %v937 = vld [vmem:[#allocation2 + $0x40] sm:$0xff]
          %v938 = vld [vmem:[#allocation2 + $0x48] sm:$0xff]
          %v939 = vld [vmem:[#allocation2 + $0x50] sm:$0xff]
          %v940 = vld [vmem:[#allocation2 + $0x58] sm:$0xff]
          %v941 = vld [vmem:[#allocation2 + $0x60] sm:$0xff]
          %v942 = vld [vmem:[#allocation2 + $0x68] sm:$0xff]
          %v943 = vld [vmem:[#allocation2 + $0x70] sm:$0xff]
          %v944 = vld [vmem:[#allocation2 + $0x78] sm:$0xff]
          %v945 = vld [vmem:[#allocation2 + $0x80] sm:$0xff]
          %v946 = vld [vmem:[#allocation2 + $0x88] sm:$0xff]
          %v947 = vld [vmem:[#allocation2 + $0x90] sm:$0xff]
          %v948 = vld [vmem:[#allocation2 + $0x98] sm:$0xff]
          %v949 = vld [vmem:[#allocation2 + $0xa0] sm:$0xff]
          %v950 = vld [vmem:[#allocation2 + $0xa8] sm:$0xff]
          %v951 = vld [vmem:[#allocation2 + $0xb0] sm:$0xff]
          %v952 = vld [vmem:[#allocation2 + $0xb8] sm:$0xff]
          %v953 = vld [vmem:[#allocation2 + $0xc0] sm:$0xff]
          %v954 = vld [vmem:[#allocation2 + $0xc8] sm:$0xff]
          %v955 = vld [vmem:[#allocation2 + $0xd0] sm:$0xff]
          %v956 = vld [vmem:[#allocation2 + $0xd8] sm:$0xff]
          %v957 = vld [vmem:[#allocation2 + $0xe0] sm:$0xff]
          %v958 = vld [vmem:[#allocation2 + $0xe8] sm:$0xff]
          %v959 = vld [vmem:[#allocation2 + $0xf0] sm:$0xff]
          %v960 = vld [vmem:[#allocation2 + $0xf8] sm:$0xff]
          %v961 = vpack.c.bf16 %v929, %v929
          %v962 = vpack.c.bf16 %v930, %v930
          %v963 = vpack.c.bf16 %v931, %v931
          %v964 = vpack.c.bf16 %v932, %v932
          %v965 = vpack.c.bf16 %v933, %v933
          %v966 = vpack.c.bf16 %v934, %v934
          %v967 = vpack.c.bf16 %v935, %v935
          %v968 = vpack.c.bf16 %v936, %v936
          %v969 = vpack.c.bf16 %v937, %v937
          %v970 = vpack.c.bf16 %v938, %v938
          %v971 = vpack.c.bf16 %v939, %v939
          %v972 = vpack.c.bf16 %v940, %v940
          %v973 = vpack.c.bf16 %v941, %v941
          %v974 = vpack.c.bf16 %v942, %v942
          %v975 = vpack.c.bf16 %v943, %v943
          %v976 = vpack.c.bf16 %v944, %v944
          %v977 = vpack.c.bf16 %v945, %v945
          %v978 = vpack.c.bf16 %v946, %v946
          %v979 = vpack.c.bf16 %v947, %v947
          %v980 = vpack.c.bf16 %v948, %v948
          %v981 = vpack.c.bf16 %v949, %v949
          %v982 = vpack.c.bf16 %v950, %v950
          %v983 = vpack.c.bf16 %v951, %v951
          %v984 = vpack.c.bf16 %v952, %v952
          %v985 = vpack.c.bf16 %v953, %v953
          %v986 = vpack.c.bf16 %v954, %v954
          %v987 = vpack.c.bf16 %v955, %v955
          %v988 = vpack.c.bf16 %v956, %v956
          %v989 = vpack.c.bf16 %v957, %v957
          %v990 = vpack.c.bf16 %v958, %v958
          %v991 = vpack.c.bf16 %v959, %v959
          %v992 = vpack.c.bf16 %v960, %v960
          %vm993 = vcmask 519168
          %994 = vst.msk [vmem:[%s303] sm:$0xf] %vm993, %v961
          %995 = vst.msk [vmem:[%s303 + $0x4] sm:$0xf] %vm993, %v962
          %996 = vst.msk [vmem:[%s303 + $0x8] sm:$0xf] %vm993, %v963
          %997 = vst.msk [vmem:[%s303 + $0xc] sm:$0xf] %vm993, %v964
          %998 = vst.msk [vmem:[%s303 + $0x10] sm:$0xf] %vm993, %v965
          %999 = vst.msk [vmem:[%s303 + $0x14] sm:$0xf] %vm993, %v966
          %1000 = vst.msk [vmem:[%s303 + $0x18] sm:$0xf] %vm993, %v967
          %1001 = vst.msk [vmem:[%s303 + $0x1c] sm:$0xf] %vm993, %v968
          %1002 = vst.msk [vmem:[%s303 + $0x20] sm:$0xf] %vm993, %v969
          %1003 = vst.msk [vmem:[%s303 + $0x24] sm:$0xf] %vm993, %v970
          %1004 = vst.msk [vmem:[%s303 + $0x28] sm:$0xf] %vm993, %v971
          %1005 = vst.msk [vmem:[%s303 + $0x2c] sm:$0xf] %vm993, %v972
          %1006 = vst.msk [vmem:[%s303 + $0x30] sm:$0xf] %vm993, %v973
          %1007 = vst.msk [vmem:[%s303 + $0x34] sm:$0xf] %vm993, %v974
          %1008 = vst.msk [vmem:[%s303 + $0x38] sm:$0xf] %vm993, %v975
          %1009 = vst.msk [vmem:[%s303 + $0x3c] sm:$0xf] %vm993, %v976
          %1010 = vst.msk [vmem:[%s303 + $0x40] sm:$0xf] %vm993, %v977
          %1011 = vst.msk [vmem:[%s303 + $0x44] sm:$0xf] %vm993, %v978
          %1012 = vst.msk [vmem:[%s303 + $0x48] sm:$0xf] %vm993, %v979
          %1013 = vst.msk [vmem:[%s303 + $0x4c] sm:$0xf] %vm993, %v980
          %1014 = vst.msk [vmem:[%s303 + $0x50] sm:$0xf] %vm993, %v981
          %1015 = vst.msk [vmem:[%s303 + $0x54] sm:$0xf] %vm993, %v982
          %1016 = vst.msk [vmem:[%s303 + $0x58] sm:$0xf] %vm993, %v983
          %1017 = vst.msk [vmem:[%s303 + $0x5c] sm:$0xf] %vm993, %v984
          %1018 = vst.msk [vmem:[%s303 + $0x60] sm:$0xf] %vm993, %v985
          %1019 = vst.msk [vmem:[%s303 + $0x64] sm:$0xf] %vm993, %v986
          %1020 = vst.msk [vmem:[%s303 + $0x68] sm:$0xf] %vm993, %v987
          %1021 = vst.msk [vmem:[%s303 + $0x6c] sm:$0xf] %vm993, %v988
          %1022 = vst.msk [vmem:[%s303 + $0x70] sm:$0xf] %vm993, %v989
          %1023 = vst.msk [vmem:[%s303 + $0x74] sm:$0xf] %vm993, %v990
          %1024 = vst.msk [vmem:[%s303 + $0x78] sm:$0xf] %vm993, %v991
          %1025 = vst.msk [vmem:[%s303 + $0x7c] sm:$0xf] %vm993, %v992
          %v1026 = vsel %vm893, %v929, 0.0
          %v1027 = vsel %vm893, %v930, 0.0
          %v1028 = vadd.f32 %v1026, %v1027
          %v1029 = vsel %vm893, %v931, 0.0
          %v1030 = vadd.f32 %v1028, %v1029
          %v1031 = vsel %vm893, %v932, 0.0
          %v1032 = vadd.f32 %v1030, %v1031
          %v1033 = vsel %vm893, %v933, 0.0
          %v1034 = vadd.f32 %v1032, %v1033
          %v1035 = vsel %vm893, %v934, 0.0
          %v1036 = vadd.f32 %v1034, %v1035
          %v1037 = vsel %vm893, %v935, 0.0
          %v1038 = vadd.f32 %v1036, %v1037
          %v1039 = vsel %vm893, %v936, 0.0
          %v1040 = vadd.f32 %v1038, %v1039
          %v1041 = vsel %vm893, %v937, 0.0
          %v1042 = vadd.f32 %v1040, %v1041
          %v1043 = vsel %vm893, %v938, 0.0
          %v1044 = vadd.f32 %v1042, %v1043
          %v1045 = vsel %vm893, %v939, 0.0
          %v1046 = vadd.f32 %v1044, %v1045
          %v1047 = vsel %vm893, %v940, 0.0
          %v1048 = vadd.f32 %v1046, %v1047
          %v1049 = vsel %vm893, %v941, 0.0
          %v1050 = vadd.f32 %v1048, %v1049
          %v1051 = vsel %vm893, %v942, 0.0
          %v1052 = vadd.f32 %v1050, %v1051
          %v1053 = vsel %vm893, %v943, 0.0
          %v1054 = vadd.f32 %v1052, %v1053
          %v1055 = vsel %vm893, %v944, 0.0
          %v1056 = vadd.f32 %v1054, %v1055
          %v1057 = vsel %vm893, %v945, 0.0
          %v1058 = vadd.f32 %v1056, %v1057
          %v1059 = vsel %vm893, %v946, 0.0
          %v1060 = vadd.f32 %v1058, %v1059
          %v1061 = vsel %vm893, %v947, 0.0
          %v1062 = vadd.f32 %v1060, %v1061
          %v1063 = vsel %vm893, %v948, 0.0
          %v1064 = vadd.f32 %v1062, %v1063
          %v1065 = vsel %vm893, %v949, 0.0
          %v1066 = vadd.f32 %v1064, %v1065
          %v1067 = vsel %vm893, %v950, 0.0
          %v1068 = vadd.f32 %v1066, %v1067
          %v1069 = vsel %vm893, %v951, 0.0
          %v1070 = vadd.f32 %v1068, %v1069
          %v1071 = vsel %vm893, %v952, 0.0
          %v1072 = vadd.f32 %v1070, %v1071
          %v1073 = vsel %vm893, %v953, 0.0
          %v1074 = vadd.f32 %v1072, %v1073
          %v1075 = vsel %vm893, %v954, 0.0
          %v1076 = vadd.f32 %v1074, %v1075
          %v1077 = vsel %vm893, %v955, 0.0
          %v1078 = vadd.f32 %v1076, %v1077
          %v1079 = vsel %vm893, %v956, 0.0
          %v1080 = vadd.f32 %v1078, %v1079
          %v1081 = vsel %vm893, %v957, 0.0
          %v1082 = vadd.f32 %v1080, %v1081
          %v1083 = vsel %vm893, %v958, 0.0
          %v1084 = vadd.f32 %v1082, %v1083
          %v1085 = vsel %vm893, %v959, 0.0
          %v1086 = vadd.f32 %v1084, %v1085
          %v1087 = vsel %vm893, %v960, 0.0
          %v1088 = vadd.f32 %v1086, %v1087
          %v1089 = vrot.slane %v1088, 4
          %v1090 = vadd.f32 %v1088, %v1089
          %v1091 = vrot.slane %v1090, 2
          %v1092 = vadd.f32 %v1090, %v1091
          %v1093 = vrot.slane %v1092, 1
          %v1094 = vadd.f32 %v1092, %v1093
          %v1095 = vmul.f32 %v929, %v929
          %v1096 = vmul.f32 %v930, %v930
          %v1097 = vmul.f32 %v931, %v931
          %v1098 = vmul.f32 %v932, %v932
          %v1099 = vmul.f32 %v933, %v933
          %v1100 = vmul.f32 %v934, %v934
          %v1101 = vmul.f32 %v935, %v935
          %v1102 = vmul.f32 %v936, %v936
          %v1103 = vmul.f32 %v937, %v937
          %v1104 = vmul.f32 %v938, %v938
          %v1105 = vmul.f32 %v939, %v939
          %v1106 = vmul.f32 %v940, %v940
          %v1107 = vmul.f32 %v941, %v941
          %v1108 = vmul.f32 %v942, %v942
          %v1109 = vmul.f32 %v943, %v943
          %v1110 = vmul.f32 %v944, %v944
          %v1111 = vmul.f32 %v945, %v945
          %v1112 = vmul.f32 %v946, %v946
          %v1113 = vmul.f32 %v947, %v947
          %v1114 = vmul.f32 %v948, %v948
          %v1115 = vmul.f32 %v949, %v949
          %v1116 = vmul.f32 %v950, %v950
          %v1117 = vmul.f32 %v951, %v951
          %v1118 = vmul.f32 %v952, %v952
          %v1119 = vmul.f32 %v953, %v953
          %v1120 = vmul.f32 %v954, %v954
          %v1121 = vmul.f32 %v955, %v955
          %v1122 = vmul.f32 %v956, %v956
          %v1123 = vmul.f32 %v957, %v957
          %v1124 = vmul.f32 %v958, %v958
          %v1125 = vmul.f32 %v959, %v959
          %v1126 = vmul.f32 %v960, %v960
          %v1127 = vsel %vm893, %v1095, 0.0
          %v1128 = vsel %vm893, %v1096, 0.0
          %v1129 = vadd.f32 %v1127, %v1128
          %v1130 = vsel %vm893, %v1097, 0.0
          %v1131 = vadd.f32 %v1129, %v1130
          %v1132 = vsel %vm893, %v1098, 0.0
          %v1133 = vadd.f32 %v1131, %v1132
          %v1134 = vsel %vm893, %v1099, 0.0
          %v1135 = vadd.f32 %v1133, %v1134
          %v1136 = vsel %vm893, %v1100, 0.0
          %v1137 = vadd.f32 %v1135, %v1136
          %v1138 = vsel %vm893, %v1101, 0.0
          %v1139 = vadd.f32 %v1137, %v1138
          %v1140 = vsel %vm893, %v1102, 0.0
          %v1141 = vadd.f32 %v1139, %v1140
          %v1142 = vsel %vm893, %v1103, 0.0
          %v1143 = vadd.f32 %v1141, %v1142
          %v1144 = vsel %vm893, %v1104, 0.0
          %v1145 = vadd.f32 %v1143, %v1144
          %v1146 = vsel %vm893, %v1105, 0.0
          %v1147 = vadd.f32 %v1145, %v1146
          %v1148 = vsel %vm893, %v1106, 0.0
          %v1149 = vadd.f32 %v1147, %v1148
          %v1150 = vsel %vm893, %v1107, 0.0
          %v1151 = vadd.f32 %v1149, %v1150
          %v1152 = vsel %vm893, %v1108, 0.0
          %v1153 = vadd.f32 %v1151, %v1152
          %v1154 = vsel %vm893, %v1109, 0.0
          %v1155 = vadd.f32 %v1153, %v1154
          %v1156 = vsel %vm893, %v1110, 0.0
          %v1157 = vadd.f32 %v1155, %v1156
          %v1158 = vsel %vm893, %v1111, 0.0
          %v1159 = vadd.f32 %v1157, %v1158
          %v1160 = vsel %vm893, %v1112, 0.0
          %v1161 = vadd.f32 %v1159, %v1160
          %v1162 = vsel %vm893, %v1113, 0.0
          %v1163 = vadd.f32 %v1161, %v1162
          %v1164 = vsel %vm893, %v1114, 0.0
          %v1165 = vadd.f32 %v1163, %v1164
          %v1166 = vsel %vm893, %v1115, 0.0
          %v1167 = vadd.f32 %v1165, %v1166
          %v1168 = vsel %vm893, %v1116, 0.0
          %v1169 = vadd.f32 %v1167, %v1168
          %v1170 = vsel %vm893, %v1117, 0.0
          %v1171 = vadd.f32 %v1169, %v1170
          %v1172 = vsel %vm893, %v1118, 0.0
          %v1173 = vadd.f32 %v1171, %v1172
          %v1174 = vsel %vm893, %v1119, 0.0
          %v1175 = vadd.f32 %v1173, %v1174
          %v1176 = vsel %vm893, %v1120, 0.0
          %v1177 = vadd.f32 %v1175, %v1176
          %v1178 = vsel %vm893, %v1121, 0.0
          %v1179 = vadd.f32 %v1177, %v1178
          %v1180 = vsel %vm893, %v1122, 0.0
          %v1181 = vadd.f32 %v1179, %v1180
          %v1182 = vsel %vm893, %v1123, 0.0
          %v1183 = vadd.f32 %v1181, %v1182
          %v1184 = vsel %vm893, %v1124, 0.0
          %v1185 = vadd.f32 %v1183, %v1184
          %v1186 = vsel %vm893, %v1125, 0.0
          %v1187 = vadd.f32 %v1185, %v1186
          %v1188 = vsel %vm893, %v1126, 0.0
          %v1189 = vadd.f32 %v1187, %v1188
          %v1190 = vrot.slane %v1189, 4
          %v1191 = vadd.f32 %v1189, %v1190
          %v1192 = vrot.slane %v1191, 2
          %v1193 = vadd.f32 %v1191, %v1192
          %v1194 = vrot.slane %v1193, 1
          %v1195 = vadd.f32 %v1193, %v1194
          %1196 = vst.msk [vmem:[%s267] sm:$0xff] %vm893, %v1094
          %1197 = vst.msk [vmem:[%s274] sm:$0xff] %vm893, %v1195
        $region36: #{tpu_custom_call.1} parent=27 // pred_fallthru
          _
        %s1198 = smul.u32 32, %s27
        %p1199 = scmp.lt.s32.totalorder %s1198, 63
        %s1200 = scalar_select %p1199, %s1198, 63
        %p1201 = scmp.lt.s32.totalorder %s28, 0
        %s1202 = scalar_select %p1201, %s28, 0
        %s1203 = sadd.s32 %s1202, %s1200
        %s1204 = smul.addr %s1203, 4
        %s1205 = scalar_lea.vmem %s2, %s1204
        %s1206 = sand.u32 %s135, 1
        %s1207 = scalar_lea.sflag [#allocation4], %s1206
        %s1208 = sand.u32 %s135, 1
        %s1209 = smul.addr %s1208, 8
        %s1210 = scalar_lea.vmem [#allocation3], %s1209
        %s1211 = sand.u32 %s163, 1
        %s1212 = scalar_lea.sflag [#allocation6], %s1211
        %s1213 = sand.u32 %s163, 1
        %s1214 = smul.addr %s1213, 8
        %s1215 = scalar_lea.vmem [#allocation5], %s1214
        // Predicated region
        $region37: #{tpu_custom_call.1} parent=27 // pred_check
          %p1216 = pneg %p117
        $region38: #{tpu_custom_call.1} parent=27 // pred_check_branch
          %1218 = sbr.rel (%p1216) target = $region40
        $region39: #{tpu_custom_call.1} parent=27 // pred_region
          %s1219 = smul.u32 32, %s27
        $region40: #{tpu_custom_call.1} parent=27 // pred_fallthru
          _
        // Predicated region
        $region41: #{tpu_custom_call.1} parent=27 // pred_check
          %p1220 = pneg %p145
        $region42: #{tpu_custom_call.1} parent=27 // pred_check_branch
          %1222 = sbr.rel (%p1220) target = $region44
        $region43: #{tpu_custom_call.1} parent=27 // pred_region
          %1224 = vsyncadd %s1207, 0
          %s1225 = sadd.s32 %s28, %s27
          %s1226 = smul.addr %s1225, 8
          %s1227 = scalar_lea.hbm %s3, %s1226
          %s1229 = sshll.u32 %s1210, 4
          %s1230 = int_to_ptr.vmem [resolvable:$true] %s1229
          %s1231 = sshll.u32 %s1227, 4
          %s1232 = int_to_ptr.hbm [resolvable:$true] %s1231
          %1234 = dma.vmem_to_hbm [thread:$0]  %s1230, 128, %s1232, %s1207
        $region44: #{tpu_custom_call.1} parent=27 // pred_fallthru
          _
        // Predicated region
        $region45: #{tpu_custom_call.1} parent=27 // pred_check
          %p1235 = pneg %p173
        $region46: #{tpu_custom_call.1} parent=27 // pred_check_branch
          %1237 = sbr.rel (%p1235) target = $region48
        $region47: #{tpu_custom_call.1} parent=27 // pred_region
          %1239 = vsyncadd %s1212, 0
          %s1240 = sadd.s32 %s28, %s27
          %s1241 = smul.addr %s1240, 8
          %s1242 = scalar_lea.hbm %s4, %s1241
          %s1244 = sshll.u32 %s1215, 4
          %s1245 = int_to_ptr.vmem [resolvable:$true] %s1244
          %s1246 = sshll.u32 %s1242, 4
          %s1247 = int_to_ptr.hbm [resolvable:$true] %s1246
          %1249 = dma.vmem_to_hbm [thread:$0]  %s1245, 128, %s1247, %s1212
        $region48: #{tpu_custom_call.1} parent=27 // pred_fallthru
          _
      $region28: #{tpu_custom_call.1} parent=5 // pred_fallthru
        _
      %p1250 = scmp.le.s32.totalorder 2, %s17
      // Predicated region
      $region49: #{tpu_custom_call.1} parent=5 // pred_check
        %p1251 = pneg %p1250
      $region50: #{tpu_custom_call.1} parent=5 // pred_check_branch
        %1253 = sbr.rel (%p1251) target = $region52
      $region51: #{tpu_custom_call.1} parent=5 // pred_region
        %s1254 = ssub.s32 %s17, 2
        // Predicated region
        $region53: #{tpu_custom_call.1} parent=51 // pred_check
          %p1255 = pneg %p123
        $region54: #{tpu_custom_call.1} parent=51 // pred_check_branch
          %1257 = sbr.rel (%p1255) target = $region56
        $region55: #{tpu_custom_call.1} parent=51 // pred_region
          %s1258 = smul.u32 32, %s30
          %p1259 = scmp.lt.s32.totalorder %s1258, 63
          %s1260 = scalar_select %p1259, %s1258, 63
          %p1261 = scmp.lt.s32.totalorder %s31, 0
          %s1262 = scalar_select %p1261, %s31, 0
          %s1263 = sadd.s32 %s1262, %s1260
          %s1264 = smul.addr %s1263, 4
          %s1265 = scalar_lea.vmem %s2, %s1264
        $region56: #{tpu_custom_call.1} parent=51 // pred_fallthru
          _
        // Predicated region
        $region57: #{tpu_custom_call.1} parent=51 // pred_check
          %p1266 = pneg %p151
        $region58: #{tpu_custom_call.1} parent=51 // pred_check_branch
          %1268 = sbr.rel (%p1266) target = $region60
        $region59: #{tpu_custom_call.1} parent=51 // pred_region
          %s1269 = sand.u32 %s136, 1
          %s1270 = scalar_lea.sflag [#allocation4], %s1269
          %s1271 = sand.u32 %s136, 1
          %s1272 = smul.addr %s1271, 8
          %s1273 = scalar_lea.vmem [#allocation3], %s1272
          %1275 = dma.done %s1270, 128
        $region60: #{tpu_custom_call.1} parent=51 // pred_fallthru
          _
        // Predicated region
        $region61: #{tpu_custom_call.1} parent=51 // pred_check
          %p1276 = pneg %p179
        $region62: #{tpu_custom_call.1} parent=51 // pred_check_branch
          %1278 = sbr.rel (%p1276) target = $region64
        $region63: #{tpu_custom_call.1} parent=51 // pred_region
          %s1279 = sand.u32 %s164, 1
          %s1280 = scalar_lea.sflag [#allocation6], %s1279
          %s1281 = sand.u32 %s164, 1
          %s1282 = smul.addr %s1281, 8
          %s1283 = scalar_lea.vmem [#allocation5], %s1282
          %1285 = dma.done %s1280, 128
        $region64: #{tpu_custom_call.1} parent=51 // pred_fallthru
          _
      $region52: #{tpu_custom_call.1} parent=5 // pred_fallthru
        _
    $region6: #{tpu_custom_call.1} parent=1 // loop_footer
      %s21 = sadd.s32 1, %s17
    $region7: #{tpu_custom_call.1} parent=1 // loop_footer_branch
      %16 = sbr.rel target = $region3
    $region8: #{tpu_custom_call.1} parent=1 // loop_exit
      _
    %1286 = vsyncpa [#allocation4], 1
    %s1287 = scalar_lea.sflag [#allocation4], 1
    %1288 = vsyncpa %s1287, 1
    %1289 = vsyncpa [#allocation6], 1
    %s1290 = scalar_lea.sflag [#allocation6], 1
    %1291 = vsyncpa %s1290, 1

</llo_original>
